<compile_context>
chip_gen: v7x
topology: tpu7x:2x2x1
jax: 0.10.0
libtpu: 0.0.40
codegen_flags: <defaults>
</compile_context>

<pallas_src>
import functools

import jax
import jax.numpy as jnp
from jax.experimental import pallas as pl
from jax.experimental.pallas import tpu as pltpu

_LANES = 128
_SUBLANES = 8
_CHUNK_ROWS = 128          # inner accumulation chunk: (128,128) f32 = 16 vregs/stream
_MAX_BLOCK_ROWS = 2048     # (2048,128) f32 = 1 MiB per stream per pipeline buffer


def _round_up(x, m):
    return ((x + m - 1) // m) * m


def _dice_sums_kernel(x_ref, t_ref, acc_ref, *, rows, chunk, valid_last, nblocks):
    """Accumulates sum(p*t), sum(p), sum(t) into a resident (3,8,128) block."""
    i = pl.program_id(0)

    @pl.when(i == 0)
    def _init():
        acc_ref[...] = jnp.zeros_like(acc_ref)

    nchunks = rows // chunk                       # static
    last_full = valid_last // chunk               # static
    last_rem = valid_last - last_full * chunk     # static
    ragged = valid_last != rows                   # static Python bool

    def vsum(v):
        # (chunk,128) -> (8,128): pure sublane-group vector adds (no XLU).
        return jnp.sum(v.reshape(chunk // _SUBLANES, _SUBLANES, _LANES), axis=0)

    def load_chunk(off):
        # Cast-on-load: bf16 logits / int8 targets widen in-register (free VPU).
        x = x_ref[pl.ds(off, chunk), :].astype(jnp.float32)
        t = t_ref[pl.ds(off, chunk), :].astype(jnp.float32)
        return x, t

    # Number of fully-valid (unmasked) chunks in this block.  All blocks except
    # possibly the last one are fully valid; the last block's count is static.
    if ragged and nblocks > 1:
        nfull = jnp.where(i == nblocks - 1, last_full, nchunks)
    elif ragged:
        nfull = last_full
    else:
        nfull = nchunks

    def body(j, carry):
        acc_i, acc_p, acc_t = carry
        off = pl.multiple_of(j * chunk, chunk)
        x, t = load_chunk(off)
        p = jax.nn.sigmoid(x)
        return acc_i + vsum(p * t), acc_p + vsum(p), acc_t + vsum(t)

    zero = jnp.zeros((_SUBLANES, _LANES), jnp.float32)
    acc_i, acc_p, acc_t = jax.lax.fori_loop(0, nfull, body, (zero, zero, zero))
    acc_ref[0, :, :] += acc_i
    acc_ref[1, :, :] += acc_p
    acc_ref[2, :, :] += acc_t

    # Ragged tail: one masked chunk, only traced when a tail statically exists
    # and only executed on the last grid step.
    if ragged and last_rem > 0:
        def _tail():
            x, t = load_chunk(last_full * chunk)
            ridx = jax.lax.broadcasted_iota(jnp.int32, (chunk, _LANES), 0)
            valid = ridx < last_rem
            # Sanitize garbage rows (possibly NaN/Inf stale VMEM) before sigmoid.
            x = jnp.where(valid, x, -1e9)    # sigmoid(-1e9) == 0 exactly
            t = jnp.where(valid, t, 0.0)
            p = jax.nn.sigmoid(x)
            acc_ref[0, :, :] += vsum(p * t)
            acc_ref[1, :, :] += vsum(p)
            acc_ref[2, :, :] += vsum(t)

        if nblocks > 1:
            pl.when(i == nblocks - 1)(_tail)
        else:
            _tail()


@functools.partial(jax.jit, static_argnames=("smooth",))
def dice_loss(inputs, targets, smooth=1.0):
    """Pallas implementation of DiceLoss.forward."""
    if inputs.ndim >= 2 and inputs.shape[1] > 1:
        # Matches torch.nn.functional.one_hot(targets, inputs.size(1)).float();
        # emitted as int8 (widened in-kernel) to keep the HBM stream narrow.
        # TODO(synk): build the one-hot in-register from streamed class ids to
        # avoid the C-times dense one-hot materialization for large C.
        targets = jax.nn.one_hot(targets, inputs.shape[1], dtype=jnp.int8)
    if inputs.shape != targets.shape:
        # TODO(synk): broadcasted shapes (e.g. NCHW logits vs NHWC one-hot, which
        # also fails in PyTorch) are not supported.
        raise ValueError(f"shape mismatch: {inputs.shape} vs {targets.shape}")

    # Keep native float dtypes in HBM (bf16 stays bf16); widen on load in-kernel.
    x = inputs if jnp.issubdtype(inputs.dtype, jnp.floating) else inputs.astype(jnp.float32)
    t = (targets if jnp.issubdtype(targets.dtype, jnp.floating)
         else targets.astype(jnp.int8))

    n = x.size
    if n == 0:
        return jnp.float32(0.0)

    xf = x.reshape(-1)   # row-major flatten: free bitcast, no HBM copy
    tf = t.reshape(-1)
    if n % _LANES != 0:
        # TODO(synk): this pad copies both streams once; only hit when the
        # element count is not a multiple of 128.  Pad values contribute
        # exactly zero (sigmoid(-1e9) == 0, target pad == 0), so no mask needed.
        pad = _LANES - n % _LANES
        xf = jnp.pad(xf, (0, pad), constant_values=-1e9)
        tf = jnp.pad(tf, (0, pad))
    total_rows = xf.size // _LANES
    x2 = xf.reshape(total_rows, _LANES)
    t2 = tf.reshape(total_rows, _LANES)

    rows = min(_MAX_BLOCK_ROWS, _round_up(total_rows, _CHUNK_ROWS))
    nblocks = pl.cdiv(total_rows, rows)
    valid_last = total_rows - (nblocks - 1) * rows   # rows of the ragged last block

    in_spec = pl.BlockSpec((rows, _LANES), lambda i: (i, 0))

    acc = pl.pallas_call(
        functools.partial(_dice_sums_kernel, rows=rows, chunk=_CHUNK_ROWS,
                          valid_last=valid_last, nblocks=nblocks),
        out_shape=jax.ShapeDtypeStruct((3, _SUBLANES, _LANES), jnp.float32),
        grid_spec=pltpu.PrefetchScalarGridSpec(
            num_scalar_prefetch=0,
            grid=(nblocks,),
            in_specs=[in_spec, in_spec],
            out_specs=pl.BlockSpec((3, _SUBLANES, _LANES), lambda i: (0, 0, 0)),
        ),
        compiler_params=pltpu.CompilerParams(
            dimension_semantics=("arbitrary",)),
    )(x2, t2)

    # Epilogue: single cross-lane reduction + scalar dice combination.
    sums = jnp.sum(acc, axis=(1, 2))
    inter, psum, tsum = sums[0], sums[1], sums[2]
    dice = (2.0 * inter + smooth) / (psum + tsum + smooth)
    return (1.0 - dice).astype(jnp.float32)


def _reference(inputs, targets, smooth=1.0):
    p = jax.nn.sigmoid(inputs.astype(jnp.float32))
    if inputs.ndim >= 2 and inputs.shape[1] > 1:
        targets = jax.nn.one_hot(targets, inputs.shape[1], dtype=jnp.float32)
    t = targets.astype(jnp.float32)
    inter = jnp.sum(p * t)
    dice = (2.0 * inter + smooth) / (jnp.sum(p) + jnp.sum(t) + smooth)
    return 1.0 - dice


if __name__ == "__main__":
    key = jax.random.PRNGKey(0)
    k1, k2, k3, k4, k5, k6, k7, k8 = jax.random.split(key, 8)

    # 1) Binary segmentation: NCHW logits (C=1), binary float targets.
    #    128-aligned element count -> zero-copy path, masked-tail chunk in-kernel.
    x1 = jax.random.normal(k1, (2, 1, 16, 16), dtype=jnp.float32)
    t1 = (jax.random.uniform(k2, (2, 1, 16, 16)) > 0.5).astype(jnp.float32)
    out1 = jax.block_until_ready(dice_loss(x1, t1, smooth=1.0))
    ref1 = _reference(x1, t1, smooth=1.0)
    assert jnp.allclose(out1, ref1, rtol=1e-5, atol=1e-5), (out1, ref1)

    # 2) Multi-class path (C > 1): 2-D logits + integer class targets (int8 one-hot).
    x2 = jax.random.normal(k3, (8, 4), dtype=jnp.float32)
    t2 = jax.random.randint(k4, (8,), 0, 4)
    out2 = jax.block_until_ready(dice_loss(x2, t2, smooth=1.0))
    ref2 = _reference(x2, t2, smooth=1.0)
    assert jnp.allclose(out2, ref2, rtol=1e-5, atol=1e-5), (out2, ref2)

    # 3) Element count not a multiple of 128: exercises the small tail pad plus
    #    the ragged last block / masked tail chunk.
    x3 = jax.random.normal(k5, (2, 1, 300, 300), dtype=jnp.float32)
    t3 = (jax.random.uniform(k6, (2, 1, 300, 300)) > 0.5).astype(jnp.float32)
    out3 = jax.block_until_ready(dice_loss(x3, t3, smooth=1.0))
    ref3 = _reference(x3, t3, smooth=1.0)
    assert jnp.allclose(out3, ref3, rtol=1e-4, atol=1e-5), (out3, ref3)

    # 4) Multi-block streaming (grid > 1), bf16 logits + bool targets:
    #    exercises cast-on-load and the narrow int8 target stream.
    x4 = jax.random.normal(k7, (2, 1, 512, 512), dtype=jnp.bfloat16)
    t4 = jax.random.uniform(k8, (2, 1, 512, 512)) > 0.5
    out4 = jax.block_until_ready(dice_loss(x4, t4, smooth=1.0))
    ref4 = _reference(x4, t4, smooth=1.0)
    assert jnp.allclose(out4, ref4, rtol=1e-3, atol=1e-3), (out4, ref4)

    print("KERNEL_OK")
</pallas_src>

<mosaic_0001>
module attributes {stable_mosaic.version = 11 : i64} {
  func.func @_dice_sums_kernel(%arg0: i32, %arg1: memref<128x128xf32, #tpu.memory_space<vmem>>, %arg2: memref<128x128xf32, #tpu.memory_space<vmem>>, %arg3: memref<3x8x128xf32, #tpu.memory_space<vmem>>) attributes {dimension_semantics = [#tpu.dimension_semantics<arbitrary>], iteration_bounds = array<i64: 1>, scalar_prefetch = 0 : i64, scratch_operands = 0 : i64, tpu.core_type = #tpu.core_type<tc>, window_params = [{transform_indices = @transform_0, window_bounds = array<i64: 128, 128>}, {transform_indices = @transform_1, window_bounds = array<i64: 128, 128>}, {pipeline_mode = #tpu.pipeline_mode<synchronous>, transform_indices = @transform_2, window_bounds = array<i64: 3, 8, 128>}]} {
    %c0_i32 = arith.constant 0 : i32
    %0 = arith.cmpi eq, %arg0, %c0_i32 : i32
    %1 = arith.extui %0 : i1 to i32
    %c0_i32_0 = arith.constant 0 : i32
    %2 = arith.cmpi ne, %1, %c0_i32_0 : i32
    scf.if %2 {
      %cst_47 = arith.constant 0.000000e+00 : f32
      %63 = vector.broadcast %cst_47 : f32 to vector<3x8x128xf32>
      %c0_48 = arith.constant 0 : index
      %c0_49 = arith.constant 0 : index
      %c0_50 = arith.constant 0 : index
      %64 = vector.load %arg3[%c0_48, %c0_49, %c0_50] : memref<3x8x128xf32, #tpu.memory_space<vmem>>, vector<3x8x128xf32>
      tpu.vector_store %arg3[%c0_48, %c0_49, %c0_50], %63 {strides = array<i32>} : memref<3x8x128xf32, #tpu.memory_space<vmem>>, vector<3x8x128xf32>,
    } else {
    }
    %cst = arith.constant 0.000000e+00 : f32
    %3 = vector.broadcast %cst : f32 to vector<8x128xf32>
    %c0_i32_1 = arith.constant 0 : i32
    %c0_i32_2 = arith.constant 0 : i32
    %4 = arith.addi %c0_i32_1, %c0_i32_2 : i32
    %c1_i32 = arith.constant 1 : i32
    %5:3 = scf.for %arg4 = %c0_i32_1 to %4 step %c1_i32 iter_args(%arg5 = %3, %arg6 = %3, %arg7 = %3) -> (vector<8x128xf32>, vector<8x128xf32>, vector<8x128xf32>)  : i32 {
      %c128_i32 = arith.constant 128 : i32
      %63 = arith.muli %arg4, %c128_i32 : i32
      %64 = tpu.assume_multiple %63, 128 : i32
      %65 = arith.index_cast %64 : i32 to index
      %c0_47 = arith.constant 0 : index
      %66 = vector.load %arg1[%65, %c0_47] : memref<128x128xf32, #tpu.memory_space<vmem>>, vector<128x128xf32>
      %67 = arith.index_cast %64 : i32 to index
      %c0_48 = arith.constant 0 : index
      %68 = vector.load %arg2[%67, %c0_48] : memref<128x128xf32, #tpu.memory_space<vmem>>, vector<128x128xf32>
      %69 = arith.negf %66 : vector<128x128xf32>
      %70 = math.exp %69 : vector<128x128xf32>
      %cst_49 = arith.constant 1.000000e+00 : f32
      %71 = vector.broadcast %cst_49 : f32 to vector<128x128xf32>
      %72 = arith.addf %71, %70 : vector<128x128xf32>
      %73 = arith.divf %71, %72 : vector<128x128xf32>
      %74 = arith.mulf %73, %68 : vector<128x128xf32>
      %75 = vector.shape_cast %74 : vector<128x128xf32> to vector<16x8x128xf32>
      %cst_50 = arith.constant dense<0.000000e+00> : vector<8x128xf32>
      %76 = vector.multi_reduction <add>, %75, %cst_50 [0] : vector<16x8x128xf32> to vector<8x128xf32>
      %77 = arith.addf %arg5, %76 : vector<8x128xf32>
      %78 = vector.shape_cast %73 : vector<128x128xf32> to vector<16x8x128xf32>
      %cst_51 = arith.constant dense<0.000000e+00> : vector<8x128xf32>
      %79 = vector.multi_reduction <add>, %78, %cst_51 [0] : vector<16x8x128xf32> to vector<8x128xf32>
      %80 = arith.addf %arg6, %79 : vector<8x128xf32>
      %81 = vector.shape_cast %68 : vector<128x128xf32> to vector<16x8x128xf32>
      %cst_52 = arith.constant dense<0.000000e+00> : vector<8x128xf32>
      %82 = vector.multi_reduction <add>, %81, %cst_52 [0] : vector<16x8x128xf32> to vector<8x128xf32>
      %83 = arith.addf %arg7, %82 : vector<8x128xf32>
      scf.yield %77, %80, %83 : vector<8x128xf32>, vector<8x128xf32>, vector<8x128xf32>
    }
    %c0_i32_3 = arith.constant 0 : i32
    %c0 = arith.constant 0 : index
    %c0_4 = arith.constant 0 : index
    %c0_5 = arith.constant 0 : index
    %6 = vector.load %arg3[%c0, %c0_4, %c0_5] : memref<3x8x128xf32, #tpu.memory_space<vmem>>, vector<1x8x128xf32>
    %7 = vector.shape_cast %6 : vector<1x8x128xf32> to vector<8x128xf32>
    %8 = arith.addf %7, %5#0 : vector<8x128xf32>
    %c0_6 = arith.constant 0 : index
    %c0_7 = arith.constant 0 : index
    %c0_8 = arith.constant 0 : index
    %9 = vector.load %arg3[%c0_6, %c0_7, %c0_8] : memref<3x8x128xf32, #tpu.memory_space<vmem>>, vector<1x8x128xf32>
    %10 = vector.shape_cast %9 : vector<1x8x128xf32> to vector<8x128xf32>
    %11 = vector.shape_cast %8 : vector<8x128xf32> to vector<1x8x128xf32>
    tpu.vector_store %arg3[%c0_6, %c0_7, %c0_8], %11 {strides = array<i32>} : memref<3x8x128xf32, #tpu.memory_space<vmem>>, vector<1x8x128xf32>,
    %c1 = arith.constant 1 : index
    %c0_9 = arith.constant 0 : index
    %c0_10 = arith.constant 0 : index
    %12 = vector.load %arg3[%c1, %c0_9, %c0_10] : memref<3x8x128xf32, #tpu.memory_space<vmem>>, vector<1x8x128xf32>
    %13 = vector.shape_cast %12 : vector<1x8x128xf32> to vector<8x128xf32>
    %14 = arith.addf %13, %5#1 : vector<8x128xf32>
    %c1_11 = arith.constant 1 : index
    %c0_12 = arith.constant 0 : index
    %c0_13 = arith.constant 0 : index
    %15 = vector.load %arg3[%c1_11, %c0_12, %c0_13] : memref<3x8x128xf32, #tpu.memory_space<vmem>>, vector<1x8x128xf32>
    %16 = vector.shape_cast %15 : vector<1x8x128xf32> to vector<8x128xf32>
    %17 = vector.shape_cast %14 : vector<8x128xf32> to vector<1x8x128xf32>
    tpu.vector_store %arg3[%c1_11, %c0_12, %c0_13], %17 {strides = array<i32>} : memref<3x8x128xf32, #tpu.memory_space<vmem>>, vector<1x8x128xf32>,
    %c2 = arith.constant 2 : index
    %c0_14 = arith.constant 0 : index
    %c0_15 = arith.constant 0 : index
    %18 = vector.load %arg3[%c2, %c0_14, %c0_15] : memref<3x8x128xf32, #tpu.memory_space<vmem>>, vector<1x8x128xf32>
    %19 = vector.shape_cast %18 : vector<1x8x128xf32> to vector<8x128xf32>
    %20 = arith.addf %19, %5#2 : vector<8x128xf32>
    %c2_16 = arith.constant 2 : index
    %c0_17 = arith.constant 0 : index
    %c0_18 = arith.constant 0 : index
    %21 = vector.load %arg3[%c2_16, %c0_17, %c0_18] : memref<3x8x128xf32, #tpu.memory_space<vmem>>, vector<1x8x128xf32>
    %22 = vector.shape_cast %21 : vector<1x8x128xf32> to vector<8x128xf32>
    %23 = vector.shape_cast %20 : vector<8x128xf32> to vector<1x8x128xf32>
    tpu.vector_store %arg3[%c2_16, %c0_17, %c0_18], %23 {strides = array<i32>} : memref<3x8x128xf32, #tpu.memory_space<vmem>>, vector<1x8x128xf32>,
    %c0_19 = arith.constant 0 : index
    %c0_20 = arith.constant 0 : index
    %24 = vector.load %arg1[%c0_19, %c0_20] : memref<128x128xf32, #tpu.memory_space<vmem>>, vector<128x128xf32>
    %c0_21 = arith.constant 0 : index
    %c0_22 = arith.constant 0 : index
    %25 = vector.load %arg2[%c0_21, %c0_22] : memref<128x128xf32, #tpu.memory_space<vmem>>, vector<128x128xf32>
    %26 = tpu.iota {dimensions = array<i32: 0>} : vector<128x128xi32>
    %c4_i32 = arith.constant 4 : i32
    %27 = vector.broadcast %c4_i32 : i32 to vector<128x128xi32>
    %28 = arith.cmpi slt, %26, %27 : vector<128x128xi32>
    %cst_23 = arith.constant -1.000000e+09 : f32
    %29 = vector.broadcast %cst_23 : f32 to vector<128x128xf32>
    %30 = arith.select %28, %24, %29 : vector<128x128xi1>, vector<128x128xf32>
    %cst_24 = arith.constant 0.000000e+00 : f32
    %31 = vector.broadcast %cst_24 : f32 to vector<128x128xf32>
    %32 = arith.select %28, %25, %31 : vector<128x128xi1>, vector<128x128xf32>
    %33 = arith.negf %30 : vector<128x128xf32>
    %34 = math.exp %33 : vector<128x128xf32>
    %cst_25 = arith.constant 1.000000e+00 : f32
    %35 = vector.broadcast %cst_25 : f32 to vector<128x128xf32>
    %36 = arith.addf %35, %34 : vector<128x128xf32>
    %37 = arith.divf %35, %36 : vector<128x128xf32>
    %c0_26 = arith.constant 0 : index
    %c0_27 = arith.constant 0 : index
    %c0_28 = arith.constant 0 : index
    %38 = vector.load %arg3[%c0_26, %c0_27, %c0_28] : memref<3x8x128xf32, #tpu.memory_space<vmem>>, vector<1x8x128xf32>
    %39 = vector.shape_cast %38 : vector<1x8x128xf32> to vector<8x128xf32>
    %40 = arith.mulf %37, %32 : vector<128x128xf32>
    %41 = vector.shape_cast %40 : vector<128x128xf32> to vector<16x8x128xf32>
    %cst_29 = arith.constant dense<0.000000e+00> : vector<8x128xf32>
    %42 = vector.multi_reduction <add>, %41, %cst_29 [0] : vector<16x8x128xf32> to vector<8x128xf32>
    %43 = arith.addf %39, %42 : vector<8x128xf32>
    %c0_30 = arith.constant 0 : index
    %c0_31 = arith.constant 0 : index
    %c0_32 = arith.constant 0 : index
    %44 = vector.load %arg3[%c0_30, %c0_31, %c0_32] : memref<3x8x128xf32, #tpu.memory_space<vmem>>, vector<1x8x128xf32>
    %45 = vector.shape_cast %44 : vector<1x8x128xf32> to vector<8x128xf32>
    %46 = vector.shape_cast %43 : vector<8x128xf32> to vector<1x8x128xf32>
    tpu.vector_store %arg3[%c0_30, %c0_31, %c0_32], %46 {strides = array<i32>} : memref<3x8x128xf32, #tpu.memory_space<vmem>>, vector<1x8x128xf32>,
    %c1_33 = arith.constant 1 : index
    %c0_34 = arith.constant 0 : index
    %c0_35 = arith.constant 0 : index
    %47 = vector.load %arg3[%c1_33, %c0_34, %c0_35] : memref<3x8x128xf32, #tpu.memory_space<vmem>>, vector<1x8x128xf32>
    %48 = vector.shape_cast %47 : vector<1x8x128xf32> to vector<8x128xf32>
    %49 = vector.shape_cast %37 : vector<128x128xf32> to vector<16x8x128xf32>
    %cst_36 = arith.constant dense<0.000000e+00> : vector<8x128xf32>
    %50 = vector.multi_reduction <add>, %49, %cst_36 [0] : vector<16x8x128xf32> to vector<8x128xf32>
    %51 = arith.addf %48, %50 : vector<8x128xf32>
    %c1_37 = arith.constant 1 : index
    %c0_38 = arith.constant 0 : index
    %c0_39 = arith.constant 0 : index
    %52 = vector.load %arg3[%c1_37, %c0_38, %c0_39] : memref<3x8x128xf32, #tpu.memory_space<vmem>>, vector<1x8x128xf32>
    %53 = vector.shape_cast %52 : vector<1x8x128xf32> to vector<8x128xf32>
    %54 = vector.shape_cast %51 : vector<8x128xf32> to vector<1x8x128xf32>
    tpu.vector_store %arg3[%c1_37, %c0_38, %c0_39], %54 {strides = array<i32>} : memref<3x8x128xf32, #tpu.memory_space<vmem>>, vector<1x8x128xf32>,
    %c2_40 = arith.constant 2 : index
    %c0_41 = arith.constant 0 : index
    %c0_42 = arith.constant 0 : index
    %55 = vector.load %arg3[%c2_40, %c0_41, %c0_42] : memref<3x8x128xf32, #tpu.memory_space<vmem>>, vector<1x8x128xf32>
    %56 = vector.shape_cast %55 : vector<1x8x128xf32> to vector<8x128xf32>
    %57 = vector.shape_cast %32 : vector<128x128xf32> to vector<16x8x128xf32>
    %cst_43 = arith.constant dense<0.000000e+00> : vector<8x128xf32>
    %58 = vector.multi_reduction <add>, %57, %cst_43 [0] : vector<16x8x128xf32> to vector<8x128xf32>
    %59 = arith.addf %56, %58 : vector<8x128xf32>
    %c2_44 = arith.constant 2 : index
    %c0_45 = arith.constant 0 : index
    %c0_46 = arith.constant 0 : index
    %60 = vector.load %arg3[%c2_44, %c0_45, %c0_46] : memref<3x8x128xf32, #tpu.memory_space<vmem>>, vector<1x8x128xf32>
    %61 = vector.shape_cast %60 : vector<1x8x128xf32> to vector<8x128xf32>
    %62 = vector.shape_cast %59 : vector<8x128xf32> to vector<1x8x128xf32>
    tpu.vector_store %arg3[%c2_44, %c0_45, %c0_46], %62 {strides = array<i32>} : memref<3x8x128xf32, #tpu.memory_space<vmem>>, vector<1x8x128xf32>,
    return
  }
  func.func @transform_0(%arg0: i32) -> (i32, i32) {
    %c0_i32 = arith.constant 0 : i32
    %c0_i32_0 = arith.constant 0 : i32
    return %arg0, %c0_i32 : i32, i32
  }
  func.func @transform_1(%arg0: i32) -> (i32, i32) {
    %c0_i32 = arith.constant 0 : i32
    %c0_i32_0 = arith.constant 0 : i32
    return %arg0, %c0_i32 : i32, i32
  }
  func.func @transform_2(%arg0: i32) -> (i32, i32, i32) {
    %c0_i32 = arith.constant 0 : i32
    %c0_i32_0 = arith.constant 0 : i32
    %c0_i32_1 = arith.constant 0 : i32
    %c0_i32_2 = arith.constant 0 : i32
    return %c0_i32, %c0_i32_0, %c0_i32_1 : i32, i32, i32
  }
}

</mosaic_0001>

<llo_original>
// kernel: dice_loss.1
$region0: #{dice_loss.1}
  #allocation0 [shape = 'u32[]', space=smem, size = 0x4, offset = 0x4, fixed_abs, tag = 'smem constant byte address 0x4 - core index']
  #allocation1 [shape = 'u32[144,128]{1,0:T(1,128)}', space=vmem, size = 0x12000, scoped, tag = 'internal scratch']
  %s0 = inlined_call_operand.vmem [shape: f32[4,128], index: 0, kind: input, shape index: {}]
  %s1 = inlined_call_operand.vmem [shape: f32[4,128], index: 1, kind: input, shape index: {}]
  %s2 = inlined_call_operand.vmem [shape: f32[3,8,128], index: 2, kind: output, shape index: {}]
  %s3 = sld [smem:[#allocation0]]
  $region22: #{dice_loss.1} parent=0
    _
  %s5 = ssub.s32 1, %s3
  %s6 = scalar_select 0, %s5, %s3
  // Predicated region
  $region2: #{dice_loss.1} parent=0 // pred_check
    _
  $region3: #{dice_loss.1} parent=0 // pred_check_branch
    %8 = sbr.rel (0) target = $region5
  $region4: #{dice_loss.1} parent=0 // pred_region
    _
  $region5: #{dice_loss.1} parent=0 // pred_fallthru
    _
  // Predicated region
  $region6: #{dice_loss.1} parent=0 // pred_check
    _
  $region7: #{dice_loss.1} parent=0 // pred_check_branch
    %10 = sbr.rel (0) target = $region9
  $region8: #{dice_loss.1} parent=0 // pred_region
    _
  $region9: #{dice_loss.1} parent=0 // pred_fallthru
    _
  %p11 = scmp.eq.s32.totalorder 0, 0
  // Predicated region
  $region10: #{dice_loss.1} parent=0 // pred_check
    %p12 = pneg %p11
  $region11: #{dice_loss.1} parent=0 // pred_check_branch
    %14 = sbr.rel (%p12) target = $region13
  $region12: #{dice_loss.1} parent=0 // pred_region
    %15 = vst [vmem:[%s2] sm:$0xff] 0.0
    %16 = vst [vmem:[%s2 + $0x8] sm:$0xff] 0.0
    %17 = vst [vmem:[%s2 + $0x10] sm:$0xff] 0.0
  $region13: #{dice_loss.1} parent=0 // pred_fallthru
    _
  %v18 = vld [vmem:[%s2] sm:$0xff]
  %v19 = vadd.f32 %v18, 0.0
  %20 = vst [vmem:[%s2] sm:$0xff] %v19
  %s21 = scalar_lea.vmem %s2, 8
  %v22 = vld [vmem:[%s21] sm:$0xff]
  %v23 = vadd.f32 %v22, 0.0
  %24 = vst [vmem:[%s21] sm:$0xff] %v23
  %s25 = scalar_lea.vmem %s2, 16
  %v26 = vld [vmem:[%s25] sm:$0xff]
  %v27 = vadd.f32 %v26, 0.0
  %28 = vst [vmem:[%s25] sm:$0xff] %v27
  %v29 = vld [vmem:[%s0] sm:$0xff]
  %v30 = vld [vmem:[%s0 + $0x8] sm:$0xff]
  %v31 = vld [vmem:[%s0 + $0x10] sm:$0xff]
  %v32 = vld [vmem:[%s0 + $0x18] sm:$0xff]
  %v33 = vld [vmem:[%s0 + $0x20] sm:$0xff]
  %v34 = vld [vmem:[%s0 + $0x28] sm:$0xff]
  %v35 = vld [vmem:[%s0 + $0x30] sm:$0xff]
  %v36 = vld [vmem:[%s0 + $0x38] sm:$0xff]
  %v37 = vld [vmem:[%s0 + $0x40] sm:$0xff]
  %v38 = vld [vmem:[%s0 + $0x48] sm:$0xff]
  %v39 = vld [vmem:[%s0 + $0x50] sm:$0xff]
  %v40 = vld [vmem:[%s0 + $0x58] sm:$0xff]
  %v41 = vld [vmem:[%s0 + $0x60] sm:$0xff]
  %v42 = vld [vmem:[%s0 + $0x68] sm:$0xff]
  %v43 = vld [vmem:[%s0 + $0x70] sm:$0xff]
  %v44 = vld [vmem:[%s0 + $0x78] sm:$0xff]
  %v45 = vld [vmem:[%s1] sm:$0xff]
  %v46 = vld [vmem:[%s1 + $0x8] sm:$0xff]
  %v47 = vld [vmem:[%s1 + $0x10] sm:$0xff]
  %v48 = vld [vmem:[%s1 + $0x18] sm:$0xff]
  %v49 = vld [vmem:[%s1 + $0x20] sm:$0xff]
  %v50 = vld [vmem:[%s1 + $0x28] sm:$0xff]
  %v51 = vld [vmem:[%s1 + $0x30] sm:$0xff]
  %v52 = vld [vmem:[%s1 + $0x38] sm:$0xff]
  %v53 = vld [vmem:[%s1 + $0x40] sm:$0xff]
  %v54 = vld [vmem:[%s1 + $0x48] sm:$0xff]
  %v55 = vld [vmem:[%s1 + $0x50] sm:$0xff]
  %v56 = vld [vmem:[%s1 + $0x58] sm:$0xff]
  %v57 = vld [vmem:[%s1 + $0x60] sm:$0xff]
  %v58 = vld [vmem:[%s1 + $0x68] sm:$0xff]
  %v59 = vld [vmem:[%s1 + $0x70] sm:$0xff]
  %v60 = vld [vmem:[%s1 + $0x78] sm:$0xff]
  %v61 = vlaneseq
  %v62 = vshrl.u32 %v61, 7
  %v63 = vadd.s32 %v62, 8
  %v64 = vadd.s32 %v62, 16
  %v65 = vadd.s32 %v62, 24
  %v66 = vadd.s32 %v62, 32
  %v67 = vadd.s32 %v62, 40
  %v68 = vadd.s32 %v62, 48
  %v69 = vadd.s32 %v62, 56
  %v70 = vadd.s32 %v62, 64
  %v71 = vadd.s32 %v62, 72
  %v72 = vadd.s32 %v62, 80
  %v73 = vadd.s32 %v62, 88
  %v74 = vadd.s32 %v62, 96
  %v75 = vadd.s32 %v62, 104
  %v76 = vadd.s32 %v62, 112
  %v77 = vadd.s32 %v62, 120
  %vm78 = vcmp.lt.s32.totalorder %v62, 4
  %vm79 = vcmp.lt.s32.totalorder %v63, 4
  %vm80 = vcmp.lt.s32.totalorder %v64, 4
  %vm81 = vcmp.lt.s32.totalorder %v65, 4
  %vm82 = vcmp.lt.s32.totalorder %v66, 4
  %vm83 = vcmp.lt.s32.totalorder %v67, 4
  %vm84 = vcmp.lt.s32.totalorder %v68, 4
  %vm85 = vcmp.lt.s32.totalorder %v69, 4
  %vm86 = vcmp.lt.s32.totalorder %v70, 4
  %vm87 = vcmp.lt.s32.totalorder %v71, 4
  %vm88 = vcmp.lt.s32.totalorder %v72, 4
  %vm89 = vcmp.lt.s32.totalorder %v73, 4
  %vm90 = vcmp.lt.s32.totalorder %v74, 4
  %vm91 = vcmp.lt.s32.totalorder %v75, 4
  %vm92 = vcmp.lt.s32.totalorder %v76, 4
  %vm93 = vcmp.lt.s32.totalorder %v77, 4
  %v94 = vsel %vm78, %v29, -1e+09
  %v95 = vsel %vm79, %v30, -1e+09
  %v96 = vsel %vm80, %v31, -1e+09
  %v97 = vsel %vm81, %v32, -1e+09
  %v98 = vsel %vm82, %v33, -1e+09
  %v99 = vsel %vm83, %v34, -1e+09
  %v100 = vsel %vm84, %v35, -1e+09
  %v101 = vsel %vm85, %v36, -1e+09
  %v102 = vsel %vm86, %v37, -1e+09
  %v103 = vsel %vm87, %v38, -1e+09
  %v104 = vsel %vm88, %v39, -1e+09
  %v105 = vsel %vm89, %v40, -1e+09
  %v106 = vsel %vm90, %v41, -1e+09
  %v107 = vsel %vm91, %v42, -1e+09
  %v108 = vsel %vm92, %v43, -1e+09
  %v109 = vsel %vm93, %v44, -1e+09
  %v110 = vsel %vm78, %v45, 0.0
  %v111 = vsel %vm79, %v46, 0.0
  %v112 = vsel %vm80, %v47, 0.0
  %v113 = vsel %vm81, %v48, 0.0
  %v114 = vsel %vm82, %v49, 0.0
  %v115 = vsel %vm83, %v50, 0.0
  %v116 = vsel %vm84, %v51, 0.0
  %v117 = vsel %vm85, %v52, 0.0
  %v118 = vsel %vm86, %v53, 0.0
  %v119 = vsel %vm87, %v54, 0.0
  %v120 = vsel %vm88, %v55, 0.0
  %v121 = vsel %vm89, %v56, 0.0
  %v122 = vsel %vm90, %v57, 0.0
  %v123 = vsel %vm91, %v58, 0.0
  %v124 = vsel %vm92, %v59, 0.0
  %v125 = vsel %vm93, %v60, 0.0
  %v126 = vxor.u32 %v94, 2147483648
  %v127 = vxor.u32 %v95, 2147483648
  %v128 = vxor.u32 %v96, 2147483648
  %v129 = vxor.u32 %v97, 2147483648
  %v130 = vxor.u32 %v98, 2147483648
  %v131 = vxor.u32 %v99, 2147483648
  %v132 = vxor.u32 %v100, 2147483648
  %v133 = vxor.u32 %v101, 2147483648
  %v134 = vxor.u32 %v102, 2147483648
  %v135 = vxor.u32 %v103, 2147483648
  %v136 = vxor.u32 %v104, 2147483648
  %v137 = vxor.u32 %v105, 2147483648
  %v138 = vxor.u32 %v106, 2147483648
  %v139 = vxor.u32 %v107, 2147483648
  %v140 = vxor.u32 %v108, 2147483648
  %v141 = vxor.u32 %v109, 2147483648
  %v142 = vmul.f32 %v126, 1.442695
  %v143 = vpow.pop %v142
  %v144 = vmul.f32 %v127, 1.442695
  %v145 = vpow.pop %v144
  %v146 = vmul.f32 %v128, 1.442695
  %v147 = vpow.pop %v146
  %v148 = vmul.f32 %v129, 1.442695
  %v149 = vpow.pop %v148
  %v150 = vmul.f32 %v130, 1.442695
  %v151 = vpow.pop %v150
  %v152 = vmul.f32 %v131, 1.442695
  %v153 = vpow.pop %v152
  %v154 = vmul.f32 %v132, 1.442695
  %v155 = vpow.pop %v154
  %v156 = vmul.f32 %v133, 1.442695
  %v157 = vpow.pop %v156
  %v158 = vmul.f32 %v134, 1.442695
  %v159 = vpow.pop %v158
  %v160 = vmul.f32 %v135, 1.442695
  %v161 = vpow.pop %v160
  %v162 = vmul.f32 %v136, 1.442695
  %v163 = vpow.pop %v162
  %v164 = vmul.f32 %v137, 1.442695
  %v165 = vpow.pop %v164
  %v166 = vmul.f32 %v138, 1.442695
  %v167 = vpow.pop %v166
  %v168 = vmul.f32 %v139, 1.442695
  %v169 = vpow.pop %v168
  %v170 = vmul.f32 %v140, 1.442695
  %v171 = vpow.pop %v170
  %v172 = vmul.f32 %v141, 1.442695
  %v173 = vpow.pop %v172
  %v174 = vadd.f32 %v143, 1.0
  %v175 = vadd.f32 %v145, 1.0
  %v176 = vadd.f32 %v147, 1.0
  %v177 = vadd.f32 %v149, 1.0
  %v178 = vadd.f32 %v151, 1.0
  %v179 = vadd.f32 %v153, 1.0
  %v180 = vadd.f32 %v155, 1.0
  %v181 = vadd.f32 %v157, 1.0
  %v182 = vadd.f32 %v159, 1.0
  %v183 = vadd.f32 %v161, 1.0
  %v184 = vadd.f32 %v163, 1.0
  %v185 = vadd.f32 %v165, 1.0
  %v186 = vadd.f32 %v167, 1.0
  %v187 = vadd.f32 %v169, 1.0
  %v188 = vadd.f32 %v171, 1.0
  %v189 = vadd.f32 %v173, 1.0
  %v190 = vrcp.pop %v174
  %v191 = vmul.f32 1.0, %v190
  %v192 = vrcp.pop %v175
  %v193 = vmul.f32 1.0, %v192
  %v194 = vrcp.pop %v176
  %v195 = vmul.f32 1.0, %v194
  %v196 = vrcp.pop %v177
  %v197 = vmul.f32 1.0, %v196
  %v198 = vrcp.pop %v178
  %v199 = vmul.f32 1.0, %v198
  %v200 = vrcp.pop %v179
  %v201 = vmul.f32 1.0, %v200
  %v202 = vrcp.pop %v180
  %v203 = vmul.f32 1.0, %v202
  %v204 = vrcp.pop %v181
  %v205 = vmul.f32 1.0, %v204
  %v206 = vrcp.pop %v182
  %v207 = vmul.f32 1.0, %v206
  %v208 = vrcp.pop %v183
  %v209 = vmul.f32 1.0, %v208
  %v210 = vrcp.pop %v184
  %v211 = vmul.f32 1.0, %v210
  %v212 = vrcp.pop %v185
  %v213 = vmul.f32 1.0, %v212
  %v214 = vrcp.pop %v186
  %v215 = vmul.f32 1.0, %v214
  %v216 = vrcp.pop %v187
  %v217 = vmul.f32 1.0, %v216
  %v218 = vrcp.pop %v188
  %v219 = vmul.f32 1.0, %v218
  %v220 = vrcp.pop %v189
  %v221 = vmul.f32 1.0, %v220
  %v222 = vld [vmem:[%s2] sm:$0xff]
  %v223 = vmul.f32 %v191, %v110
  %v224 = vmul.f32 %v193, %v111
  %v225 = vmul.f32 %v195, %v112
  %v226 = vmul.f32 %v197, %v113
  %v227 = vmul.f32 %v199, %v114
  %v228 = vmul.f32 %v201, %v115
  %v229 = vmul.f32 %v203, %v116
  %v230 = vmul.f32 %v205, %v117
  %v231 = vmul.f32 %v207, %v118
  %v232 = vmul.f32 %v209, %v119
  %v233 = vmul.f32 %v211, %v120
  %v234 = vmul.f32 %v213, %v121
  %v235 = vmul.f32 %v215, %v122
  %v236 = vmul.f32 %v217, %v123
  %v237 = vmul.f32 %v219, %v124
  %v238 = vmul.f32 %v221, %v125
  %v239 = vadd.f32 %v223, %v224
  %v240 = vadd.f32 %v239, %v225
  %v241 = vadd.f32 %v240, %v226
  %v242 = vadd.f32 %v241, %v227
  %v243 = vadd.f32 %v242, %v228
  %v244 = vadd.f32 %v243, %v229
  %v245 = vadd.f32 %v244, %v230
  %v246 = vadd.f32 %v245, %v231
  %v247 = vadd.f32 %v246, %v232
  %v248 = vadd.f32 %v247, %v233
  %v249 = vadd.f32 %v248, %v234
  %v250 = vadd.f32 %v249, %v235
  %v251 = vadd.f32 %v250, %v236
  %v252 = vadd.f32 %v251, %v237
  %v253 = vadd.f32 %v252, %v238
  %v254 = vadd.f32 %v222, %v253
  %255 = vst [vmem:[%s2] sm:$0xff] %v254
  %v256 = vld [vmem:[%s21] sm:$0xff]
  %v257 = vadd.f32 %v191, %v193
  %v258 = vadd.f32 %v257, %v195
  %v259 = vadd.f32 %v258, %v197
  %v260 = vadd.f32 %v259, %v199
  %v261 = vadd.f32 %v260, %v201
  %v262 = vadd.f32 %v261, %v203
  %v263 = vadd.f32 %v262, %v205
  %v264 = vadd.f32 %v263, %v207
  %v265 = vadd.f32 %v264, %v209
  %v266 = vadd.f32 %v265, %v211
  %v267 = vadd.f32 %v266, %v213
  %v268 = vadd.f32 %v267, %v215
  %v269 = vadd.f32 %v268, %v217
  %v270 = vadd.f32 %v269, %v219
  %v271 = vadd.f32 %v270, %v221
  %v272 = vadd.f32 %v256, %v271
  %273 = vst [vmem:[%s21] sm:$0xff] %v272
  %v274 = vld [vmem:[%s25] sm:$0xff]
  %v275 = vadd.f32 %v110, %v111
  %v276 = vadd.f32 %v275, %v112
  %v277 = vadd.f32 %v276, %v113
  %v278 = vadd.f32 %v277, %v114
  %v279 = vadd.f32 %v278, %v115
  %v280 = vadd.f32 %v279, %v116
  %v281 = vadd.f32 %v280, %v117
  %v282 = vadd.f32 %v281, %v118
  %v283 = vadd.f32 %v282, %v119
  %v284 = vadd.f32 %v283, %v120
  %v285 = vadd.f32 %v284, %v121
  %v286 = vadd.f32 %v285, %v122
  %v287 = vadd.f32 %v286, %v123
  %v288 = vadd.f32 %v287, %v124
  %v289 = vadd.f32 %v288, %v125
  %v290 = vadd.f32 %v274, %v289
  %291 = vst [vmem:[%s25] sm:$0xff] %v290
  // Predicated region
  $region14: #{dice_loss.1} parent=0 // pred_check
    _
  $region15: #{dice_loss.1} parent=0 // pred_check_branch
    %293 = sbr.rel (0) target = $region17
  $region16: #{dice_loss.1} parent=0 // pred_region
    _
  $region17: #{dice_loss.1} parent=0 // pred_fallthru
    _
  // Predicated region
  $region18: #{dice_loss.1} parent=0 // pred_check
    _
  $region19: #{dice_loss.1} parent=0 // pred_check_branch
    %295 = sbr.rel (0) target = $region21
  $region20: #{dice_loss.1} parent=0 // pred_region
    _
  $region21: #{dice_loss.1} parent=0 // pred_fallthru
    _

</llo_original>
